<compile_context>
chip_gen: v7x
topology: tpu7x:2x2x1
jax: 0.10.0
libtpu: 0.0.40
codegen_flags: <defaults>
</compile_context>

<pallas_src>
import inspect

import jax
import jax.numpy as jnp
from jax.experimental import pallas as pl
from jax.experimental.pallas import tpu as pltpu


# --------------------------------------------------------------------------- #
# helpers
# --------------------------------------------------------------------------- #
def _round_up(a, b):
    return (a + b - 1) // b * b


def _supports_buffered():
    if not hasattr(pl, "Buffered"):
        return False
    try:
        return "pipeline_mode" in inspect.signature(pl.BlockSpec).parameters
    except (TypeError, ValueError):
        return False


_HAS_BUFFERED = _supports_buffered()


def _device_vmem_bytes():
    # Per-core VMEM capacity (v5e/v6e: 128 MiB, v7x: 64 MiB per TC).
    # Conservative 64 MiB fallback if the query is unavailable.
    try:
        cap = getattr(pltpu.get_tpu_info(), "vmem_capacity_bytes", None)
        if cap:
            return int(cap)
    except Exception:  # hardware-info query only — never wraps kernel execution
        pass
    return 64 * 1024 * 1024


def _pick_tile_m(m, tile_m_req):
    """Largest 8-aligned row tile <= tile_m_req with small padding waste.

    For reasonably large inputs the tile is capped so the row-grid has at
    least 2–4 steps (keeps both v7x TensorCores busy under
    dimension_semantics=("parallel",)); on 1-TC chips the extra step boundary
    is negligible.
    """
    m8 = _round_up(max(m, 1), 8)
    t_max = max(8, min(_round_up(tile_m_req, 8), m8))
    if m8 >= 4 * 128:
        t_max = min(t_max, _round_up(-(-m8 // 4), 8))
    elif m8 >= 2 * 128:
        t_max = min(t_max, _round_up(-(-m8 // 2), 8))
    for t in range(t_max, 7, -8):
        padded = _round_up(m8, t)
        if padded - m8 <= max(t // 4, padded // 16):  # accept small relative waste
            return t
    return 8


# --------------------------------------------------------------------------- #
# kernels
# --------------------------------------------------------------------------- #
def _ffn_resident_kernel(x_ref, w1_ref, b1_ref, w2_ref, b2_ref, o_ref):
    # x: (tm, Hp); w1/w2: (Hp, Hp) already in (in, out) layout; b1/b2: (1, Hp) f32.
    h = jnp.dot(x_ref[...], w1_ref[...], preferred_element_type=jnp.float32)
    h = jnp.maximum(h + b1_ref[...], 0.0)          # bias + ReLU in f32 on the VPU
    # dropout: eval mode -> identity (see module-level TODO)
    h = h.astype(w2_ref.dtype)
    y = jnp.dot(h, w2_ref[...], preferred_element_type=jnp.float32)
    o_ref[...] = (y + b2_ref[...]).astype(o_ref.dtype)


def _ffn_stream_kernel(x_ref, w1_ref, b1_ref, w2_ref, b2_ref, o_ref, acc_ref):
    # Grid (M/tm, Hp/tn): j tiles fc1's output dim == fc2's contraction dim.
    j = pl.program_id(1)

    @pl.when(j == 0)
    def _():
        acc_ref[...] = jnp.zeros_like(acc_ref)

    h = jnp.dot(x_ref[...], w1_ref[...], preferred_element_type=jnp.float32)
    h = jnp.maximum(h + b1_ref[...], 0.0)
    # dropout: eval mode -> identity
    h = h.astype(w2_ref.dtype)
    acc_ref[...] += jnp.dot(h, w2_ref[...], preferred_element_type=jnp.float32)

    @pl.when(j == pl.num_programs(1) - 1)
    def _():
        o_ref[...] = (acc_ref[...] + b2_ref[...]).astype(o_ref.dtype)


# --------------------------------------------------------------------------- #
# wrapper
# --------------------------------------------------------------------------- #
def knowformer_ffn(x, w1, b1, w2, b2, *, drop=0.0, tile_m=None,
                   compute_dtype="auto", force_stream=False):
    """KnowformerFFN forward (eval mode): fc2(dropout(relu(fc1(x)))).

    x: (..., H).  w1, w2: (H, H) in PyTorch (out, in) layout.  b1, b2: (H,).
    `drop` is accepted for API parity but has no effect in eval mode.
    compute_dtype: "auto" (bf16 matmul operands, f32 accumulation — the MXU
    fast path) or an explicit dtype such as jnp.float32 for full precision.
    """
    orig_shape = x.shape
    out_dtype = x.dtype
    H = orig_shape[-1]
    x2 = x.reshape(-1, H)
    M = x2.shape[0]

    if compute_dtype is None:
        compute_dtype = x.dtype
    if isinstance(compute_dtype, str):            # "auto"
        compute_dtype = jnp.bfloat16 if x.dtype == jnp.float32 else x.dtype
    cdtype = jnp.dtype(compute_dtype)

    x_isz = cdtype.itemsize
    w_isz = cdtype.itemsize
    o_isz = jnp.dtype(out_dtype).itemsize

    # Lane-dense hidden dim (multiple of 128) -> unmasked vector stores.
    Hp = _round_up(H, 128)

    device_vmem = _device_vmem_bytes()
    budget = device_vmem - (8 << 20)              # headroom for compiler scratch

    if tile_m is None:
        tile_m = 512 if device_vmem >= (96 << 20) else 256
    tm = _pick_tile_m(M, tile_m)

    # ---- choose resident vs. streamed-weights path ------------------------ #
    wbuf = 1 if _HAS_BUFFERED else 2              # weight buffer count actually used
    resident_need = (wbuf * 2 * Hp * Hp * w_isz   # w1_t + w2_t (VMEM resident)
                     + wbuf * 2 * Hp * 4          # biases (f32)
                     + 2 * tm * Hp * x_isz        # x row tiles (double buffered)
                     + 2 * tm * Hp * o_isz        # out row tiles
                     + 2 * tm * Hp * 4)           # f32 h / y temporaries
    use_stream = bool(force_stream) or resident_need > budget

    if use_stream:
        def _stream_need(tm_, tn_):
            return (2 * tm_ * Hp * x_isz          # x row tiles
                    + 2 * Hp * tn_ * w_isz        # w1_t column tiles
                    + 2 * tn_ * Hp * w_isz        # w2_t row tiles
                    + 2 * tm_ * Hp * o_isz        # out row tiles
                    + tm_ * Hp * 4                # f32 accumulator scratch
                    + tm_ * tn_ * 4               # f32 h tile
                    + 2 * Hp * 4)                 # biases

        tn = None
        for cand in (512, 256, 128):
            if Hp % cand == 0 and _stream_need(tm, cand) <= budget:
                tn = cand
                break
        if tn is None:
            tn = 128                              # Hp is always a multiple of 128
            while tm > 64 and _stream_need(tm, tn) > budget:
                tm = max(64, _round_up(tm // 2, 8))
        need = _stream_need(tm, tn)
    else:
        tn = Hp
        need = resident_need

    m_padded = _round_up(M, tm)

    # ---- prepare operands -------------------------------------------------- #
    # One-time transpose to (in, out) layout so both matmuls are canonical
    # x @ w contractions (no in-kernel weight transpose on the XLU).
    w1_t = w1.T.astype(cdtype)
    w2_t = w2.T.astype(cdtype)
    b1r = b1.astype(jnp.float32).reshape(1, H)
    b2r = b2.astype(jnp.float32).reshape(1, H)

    x2 = x2.astype(cdtype)
    pad_m, pad_h = m_padded - M, Hp - H
    if pad_m or pad_h:
        x2 = jnp.pad(x2, ((0, pad_m), (0, pad_h)))
    if pad_h:
        w1_t = jnp.pad(w1_t, ((0, pad_h), (0, pad_h)))
        w2_t = jnp.pad(w2_t, ((0, pad_h), (0, pad_h)))
        b1r = jnp.pad(b1r, ((0, 0), (0, pad_h)))
        b2r = jnp.pad(b2r, ((0, 0), (0, pad_h)))

    vmem_limit = int(max(min(device_vmem - (2 << 20), need + (8 << 20)), 16 << 20))
    cost = pl.CostEstimate(
        flops=4 * m_padded * Hp * Hp,             # two matmuls, 2*M*K*N each
        transcendentals=0,
        bytes_accessed=int(m_padded * Hp * (x_isz + o_isz)
                           + (m_padded // tm if use_stream else 1) * 2 * Hp * Hp * w_isz
                           + 2 * Hp * 4),
    )

    if not use_stream:
        resident_kw = {"pipeline_mode": pl.Buffered(1)} if _HAS_BUFFERED else {}
        in_specs = [
            pl.BlockSpec((tm, Hp), lambda i: (i, 0)),                 # x row tile
            pl.BlockSpec((Hp, Hp), lambda i: (0, 0), **resident_kw),  # w1_t resident
            pl.BlockSpec((1, Hp), lambda i: (0, 0), **resident_kw),   # b1 resident
            pl.BlockSpec((Hp, Hp), lambda i: (0, 0), **resident_kw),  # w2_t resident
            pl.BlockSpec((1, Hp), lambda i: (0, 0), **resident_kw),   # b2 resident
        ]
        out = pl.pallas_call(
            _ffn_resident_kernel,
            out_shape=jax.ShapeDtypeStruct((m_padded, Hp), out_dtype),
            grid_spec=pltpu.PrefetchScalarGridSpec(
                num_scalar_prefetch=0,
                grid=(m_padded // tm,),
                in_specs=in_specs,
                out_specs=pl.BlockSpec((tm, Hp), lambda i: (i, 0)),
            ),
            compiler_params=pltpu.CompilerParams(
                dimension_semantics=("parallel",),
                vmem_limit_bytes=vmem_limit),
            cost_estimate=cost,
        )(x2, w1_t, b1r, w2_t, b2r)
    else:
        in_specs = [
            pl.BlockSpec((tm, Hp), lambda i, j: (i, 0)),   # x row tile (reused over j)
            pl.BlockSpec((Hp, tn), lambda i, j: (0, j)),   # w1_t column tile
            pl.BlockSpec((1, tn), lambda i, j: (0, j)),    # b1 tile
            pl.BlockSpec((tn, Hp), lambda i, j: (j, 0)),   # w2_t row tile
            pl.BlockSpec((1, Hp), lambda i, j: (0, 0)),    # b2 (constant)
        ]
        out = pl.pallas_call(
            _ffn_stream_kernel,
            out_shape=jax.ShapeDtypeStruct((m_padded, Hp), out_dtype),
            grid_spec=pltpu.PrefetchScalarGridSpec(
                num_scalar_prefetch=0,
                grid=(m_padded // tm, Hp // tn),
                in_specs=in_specs,
                out_specs=pl.BlockSpec((tm, Hp), lambda i, j: (i, 0)),
                scratch_shapes=[pltpu.VMEM((tm, Hp), jnp.float32)],
            ),
            compiler_params=pltpu.CompilerParams(
                dimension_semantics=("parallel", "arbitrary"),
                vmem_limit_bytes=vmem_limit),
            cost_estimate=cost,
        )(x2, w1_t, b1r, w2_t, b2r)

    # Padded rows/lanes carry junk / zeros — slice them off before reshaping.
    if pad_m or pad_h:
        out = out[:M, :H]
    return out.reshape(orig_shape)


# --------------------------------------------------------------------------- #
# reference + demo
# --------------------------------------------------------------------------- #
def _reference(x, w1, b1, w2, b2):
    h = jnp.maximum(x @ w1.T + b1, 0.0)
    return h @ w2.T + b2


if __name__ == "__main__":
    key = jax.random.PRNGKey(0)
    batch, seq, hidden = 2, 8, 32   # NOTE: tiny demo shape; real hidden dims
    drop = 0.1                      # (multiples of 128) skip the lane padding.

    kx, k1, k2, k3, k4 = jax.random.split(key, 5)
    x = jax.random.normal(kx, (batch, seq, hidden), dtype=jnp.float32)

    # PyTorch Linear-style parameters: weight (out, in), bias (out,).
    bound = 1.0 / (hidden ** 0.5)
    w1 = jax.random.uniform(k1, (hidden, hidden), jnp.float32, -bound, bound)
    b1 = jax.random.uniform(k2, (hidden,), jnp.float32, -bound, bound)
    w2 = jax.random.uniform(k3, (hidden, hidden), jnp.float32, -bound, bound)
    b2 = jax.random.uniform(k4, (hidden,), jnp.float32, -bound, bound)

    ref = _reference(x, w1, b1, w2, b2)

    # 1) f32 compute path, resident weights: tight match vs reference.
    out = jax.block_until_ready(
        knowformer_ffn(x, w1, b1, w2, b2, drop=drop, compute_dtype=jnp.float32))
    assert out.shape == x.shape
    assert jnp.allclose(out, ref, atol=1e-4, rtol=1e-4), "f32 mismatch vs reference"

    # 2) default path (bf16 matmul operands, f32 accumulation): looser tolerance.
    out_bf = jax.block_until_ready(knowformer_ffn(x, w1, b1, w2, b2, drop=drop))
    assert out_bf.shape == x.shape
    assert jnp.allclose(out_bf, ref, atol=5e-2, rtol=5e-2), "bf16 mismatch vs reference"

    # 3) ragged row count + streamed-weights path (f32): exercises the
    #    pad/slice logic and the K-tiled accumulator kernel.
    x_ragged = x[:, :7, :]
    out_r = jax.block_until_ready(
        knowformer_ffn(x_ragged, w1, b1, w2, b2, drop=drop,
                       compute_dtype=jnp.float32, force_stream=True))
    ref_r = _reference(x_ragged, w1, b1, w2, b2)
    assert out_r.shape == x_ragged.shape
    assert jnp.allclose(out_r, ref_r, atol=1e-4, rtol=1e-4), "streamed/ragged mismatch"

    print("KERNEL_OK")
</pallas_src>

<mosaic_0001>
module attributes {stable_mosaic.version = 11 : i64} {
  func.func @_ffn_resident_kernel(%arg0: i32, %arg1: memref<16x128xf32, #tpu.memory_space<vmem>>, %arg2: memref<128x128xf32, #tpu.memory_space<vmem>>, %arg3: memref<1x128xf32, #tpu.memory_space<vmem>>, %arg4: memref<128x128xf32, #tpu.memory_space<vmem>>, %arg5: memref<1x128xf32, #tpu.memory_space<vmem>>, %arg6: memref<16x128xf32, #tpu.memory_space<vmem>>) attributes {dimension_semantics = [#tpu.dimension_semantics<parallel>], iteration_bounds = array<i64: 1>, scalar_prefetch = 0 : i64, scratch_operands = 0 : i64, tpu.core_type = #tpu.core_type<tc>, window_params = [{transform_indices = @transform_0, window_bounds = array<i64: 16, 128>}, {pipeline_mode = #tpu.pipeline_mode<synchronous>, transform_indices = @transform_1, window_bounds = array<i64: 128, 128>}, {pipeline_mode = #tpu.pipeline_mode<synchronous>, transform_indices = @transform_2, window_bounds = array<i64: 1, 128>}, {pipeline_mode = #tpu.pipeline_mode<synchronous>, transform_indices = @transform_3, window_bounds = array<i64: 128, 128>}, {pipeline_mode = #tpu.pipeline_mode<synchronous>, transform_indices = @transform_4, window_bounds = array<i64: 1, 128>}, {transform_indices = @transform_5, window_bounds = array<i64: 16, 128>}]} {
    %c0 = arith.constant 0 : index
    %c0_0 = arith.constant 0 : index
    %0 = vector.load %arg1[%c0, %c0_0] : memref<16x128xf32, #tpu.memory_space<vmem>>, vector<16x128xf32>
    %c0_1 = arith.constant 0 : index
    %c0_2 = arith.constant 0 : index
    %1 = vector.load %arg2[%c0_1, %c0_2] : memref<128x128xf32, #tpu.memory_space<vmem>>, vector<128x128xf32>
    %cst = arith.constant dense<0.000000e+00> : vector<16x128xf32>
    %2 = tpu.matmul %0, %1, %cst {dimension_numbers = #tpu.dot_dimension_numbers<[1], [0], [0], [1], [0, 0, 1, 1], [], []>} : vector<16x128xf32>, vector<128x128xf32>, vector<16x128xf32> -> vector<16x128xf32>
    %c0_3 = arith.constant 0 : index
    %c0_4 = arith.constant 0 : index
    %3 = vector.load %arg3[%c0_3, %c0_4] : memref<1x128xf32, #tpu.memory_space<vmem>>, vector<1x128xf32>
    %4 = vector.broadcast %3 : vector<1x128xf32> to vector<16x128xf32>
    %5 = arith.addf %2, %4 : vector<16x128xf32>
    %cst_5 = arith.constant 0.000000e+00 : f32
    %6 = vector.broadcast %cst_5 : f32 to vector<16x128xf32>
    %7 = arith.maximumf %5, %6 : vector<16x128xf32>
    %c0_6 = arith.constant 0 : index
    %c0_7 = arith.constant 0 : index
    %8 = vector.load %arg4[%c0_6, %c0_7] : memref<128x128xf32, #tpu.memory_space<vmem>>, vector<128x128xf32>
    %cst_8 = arith.constant dense<0.000000e+00> : vector<16x128xf32>
    %9 = tpu.matmul %7, %8, %cst_8 {dimension_numbers = #tpu.dot_dimension_numbers<[1], [0], [0], [1], [0, 0, 1, 1], [], []>} : vector<16x128xf32>, vector<128x128xf32>, vector<16x128xf32> -> vector<16x128xf32>
    %c0_9 = arith.constant 0 : index
    %c0_10 = arith.constant 0 : index
    %10 = vector.load %arg5[%c0_9, %c0_10] : memref<1x128xf32, #tpu.memory_space<vmem>>, vector<1x128xf32>
    %11 = vector.broadcast %10 : vector<1x128xf32> to vector<16x128xf32>
    %12 = arith.addf %9, %11 : vector<16x128xf32>
    %c0_11 = arith.constant 0 : index
    %c0_12 = arith.constant 0 : index
    %13 = vector.load %arg6[%c0_11, %c0_12] : memref<16x128xf32, #tpu.memory_space<vmem>>, vector<16x128xf32>
    tpu.vector_store %arg6[%c0_11, %c0_12], %12 {strides = array<i32>} : memref<16x128xf32, #tpu.memory_space<vmem>>, vector<16x128xf32>,
    return
  }
  func.func @transform_0(%arg0: i32) -> (i32, i32) {
    %c0_i32 = arith.constant 0 : i32
    %c0_i32_0 = arith.constant 0 : i32
    return %arg0, %c0_i32 : i32, i32
  }
  func.func @transform_1(%arg0: i32) -> (i32, i32) {
    %c0_i32 = arith.constant 0 : i32
    %c0_i32_0 = arith.constant 0 : i32
    %c0_i32_1 = arith.constant 0 : i32
    return %c0_i32, %c0_i32_0 : i32, i32
  }
  func.func @transform_2(%arg0: i32) -> (i32, i32) {
    %c0_i32 = arith.constant 0 : i32
    %c0_i32_0 = arith.constant 0 : i32
    %c0_i32_1 = arith.constant 0 : i32
    return %c0_i32, %c0_i32_0 : i32, i32
  }
  func.func @transform_3(%arg0: i32) -> (i32, i32) {
    %c0_i32 = arith.constant 0 : i32
    %c0_i32_0 = arith.constant 0 : i32
    %c0_i32_1 = arith.constant 0 : i32
    return %c0_i32, %c0_i32_0 : i32, i32
  }
  func.func @transform_4(%arg0: i32) -> (i32, i32) {
    %c0_i32 = arith.constant 0 : i32
    %c0_i32_0 = arith.constant 0 : i32
    %c0_i32_1 = arith.constant 0 : i32
    return %c0_i32, %c0_i32_0 : i32, i32
  }
  func.func @transform_5(%arg0: i32) -> (i32, i32) {
    %c0_i32 = arith.constant 0 : i32
    %c0_i32_0 = arith.constant 0 : i32
    return %arg0, %c0_i32 : i32, i32
  }
}

</mosaic_0001>

<llo_original>
// kernel: tpu_custom_call.1
$region0: #{tpu_custom_call.1}
  #allocation0 [shape = 'u32[]', space=smem, size = 0x4, offset = 0x4, fixed_abs, tag = 'smem constant byte address 0x4 - core index']
  #allocation1 [shape = 'u32[144,128]{1,0:T(1,128)}', space=vmem, size = 0x12000, scoped, tag = 'internal scratch']
  %s0 = inlined_call_operand.hbm [shape: f32[16,128], index: 0, kind: input, shape index: {}]
  %s1 = inlined_call_operand.hbm [shape: f32[128,128], index: 1, kind: input, shape index: {}]
  %s2 = inlined_call_operand.vmem [shape: f32[1,128], index: 2, kind: input, shape index: {}]
  %s3 = inlined_call_operand.hbm [shape: f32[128,128], index: 3, kind: input, shape index: {}]
  %s4 = inlined_call_operand.vmem [shape: f32[1,128], index: 4, kind: input, shape index: {}]
  %s5 = inlined_call_operand.hbm [shape: f32[16,128], index: 5, kind: output, shape index: {}]
  %s6 = sld [smem:[#allocation0]]
  $region42: #{tpu_custom_call.1} parent=0
    _
  %s8 = ssub.s32 1, %s6
  %s9 = scalar_select 0, %s8, %s6
  $region1: #{tpu_custom_call.1} parent=0
    #allocation2 [shape = 'u8[8192]{0}', space=vmem, size = 0x2000, scoped, tag = 'input window, operand 0, single buffered']
    #allocation3 [shape = 's32[1]{0}', space=sflag, size = 0x4, scoped, tag = 'scoped memory for tpu_custom_call.1']
    #allocation4 [shape = 's32[1]{0}', space=sflag, size = 0x4, scoped, tag = 'scoped memory for tpu_custom_call.1']
    #allocation5 [shape = 'u8[65536]{0}', space=vmem, size = 0x10000, scoped, tag = 'input window, operand 1, single buffered']
    #allocation6 [shape = 's32[1]{0}', space=sflag, size = 0x4, scoped, tag = 'scoped memory for tpu_custom_call.1']
    #allocation7 [shape = 'u8[65536]{0}', space=vmem, size = 0x10000, scoped, tag = 'input window, operand 3, single buffered']
    #allocation8 [shape = 'u8[8192]{0}', space=vmem, size = 0x2000, scoped, tag = 'output window, operand 0, single buffered']
    %10 = vsyncpa [#allocation3], 0
    %11 = vsyncpa [#allocation6], 0
    %12 = vsyncpa [#allocation4], 0
    // Predicated region
    $region2: #{tpu_custom_call.1} parent=1 // pred_check
      _
    $region3: #{tpu_custom_call.1} parent=1 // pred_check_branch
      %14 = sbr.rel (0) target = $region5
    $region4: #{tpu_custom_call.1} parent=1 // pred_region
      %s16 = ssub.s32 256, 256
      %17 = vsyncadd [#allocation3], %s16
      %s18 = sshll.u32 [#allocation2], 4
      %s19 = int_to_ptr.vmem [resolvable:$true] %s18
      %24 = dma.hbm_to_vmem [thread:$0]  %s0, 256, %s19, [#allocation3], 128, 128, 8
    $region5: #{tpu_custom_call.1} parent=1 // pred_fallthru
      _
    // Predicated region
    $region6: #{tpu_custom_call.1} parent=1 // pred_check
      _
    $region7: #{tpu_custom_call.1} parent=1 // pred_check_branch
      %26 = sbr.rel (0) target = $region9
    $region8: #{tpu_custom_call.1} parent=1 // pred_region
      %s28 = ssub.s32 2048, 2048
      %29 = vsyncadd [#allocation6], %s28
      %s30 = sshll.u32 [#allocation5], 4
      %s31 = int_to_ptr.vmem [resolvable:$true] %s30
      %36 = dma.hbm_to_vmem [thread:$0]  %s1, 2048, %s31, [#allocation6], 128, 128, 8
    $region9: #{tpu_custom_call.1} parent=1 // pred_fallthru
      _
    // Predicated region
    $region10: #{tpu_custom_call.1} parent=1 // pred_check
      _
    $region11: #{tpu_custom_call.1} parent=1 // pred_check_branch
      %38 = sbr.rel (0) target = $region13
    $region12: #{tpu_custom_call.1} parent=1 // pred_region
      _
    $region13: #{tpu_custom_call.1} parent=1 // pred_fallthru
      _
    // Predicated region
    $region14: #{tpu_custom_call.1} parent=1 // pred_check
      _
    $region15: #{tpu_custom_call.1} parent=1 // pred_check_branch
      %40 = sbr.rel (0) target = $region17
    $region16: #{tpu_custom_call.1} parent=1 // pred_region
      %s42 = ssub.s32 2048, 2048
      %43 = vsyncadd [#allocation6], %s42
      %s44 = sshll.u32 [#allocation7], 4
      %s45 = int_to_ptr.vmem [resolvable:$true] %s44
      %50 = dma.hbm_to_vmem [thread:$0]  %s3, 2048, %s45, [#allocation6], 128, 128, 8
    $region17: #{tpu_custom_call.1} parent=1 // pred_fallthru
      _
    // Predicated region
    $region18: #{tpu_custom_call.1} parent=1 // pred_check
      _
    $region19: #{tpu_custom_call.1} parent=1 // pred_check_branch
      %52 = sbr.rel (0) target = $region21
    $region20: #{tpu_custom_call.1} parent=1 // pred_region
      _
    $region21: #{tpu_custom_call.1} parent=1 // pred_fallthru
      _
    // Predicated region
    $region22: #{tpu_custom_call.1} parent=1 // pred_check
      _
    $region23: #{tpu_custom_call.1} parent=1 // pred_check_branch
      %54 = sbr.rel (0) target = $region25
    $region24: #{tpu_custom_call.1} parent=1 // pred_region
      %55 = dma.done [#allocation3], 256
    $region25: #{tpu_custom_call.1} parent=1 // pred_fallthru
      _
    // Predicated region
    $region26: #{tpu_custom_call.1} parent=1 // pred_check
      _
    $region27: #{tpu_custom_call.1} parent=1 // pred_check_branch
      %57 = sbr.rel (0) target = $region29
    $region28: #{tpu_custom_call.1} parent=1 // pred_region
      %58 = dma.done [#allocation6], 2048
    $region29: #{tpu_custom_call.1} parent=1 // pred_fallthru
      _
    // Predicated region
    $region30: #{tpu_custom_call.1} parent=1 // pred_check
      _
    $region31: #{tpu_custom_call.1} parent=1 // pred_check_branch
      %60 = sbr.rel (0) target = $region33
    $region32: #{tpu_custom_call.1} parent=1 // pred_region
      %61 = dma.done [#allocation6], 2048
    $region33: #{tpu_custom_call.1} parent=1 // pred_fallthru
      _
    %v62 = vld [vmem:[#allocation2] sm:$0xff]
    %v63 = vld [vmem:[#allocation2 + $0x8] sm:$0xff]
    %v64 = vld [vmem:[#allocation5] sm:$0xff]
    %v65 = vld [vmem:[#allocation5 + $0x8] sm:$0xff]
    %v66 = vld [vmem:[#allocation5 + $0x10] sm:$0xff]
    %v67 = vld [vmem:[#allocation5 + $0x18] sm:$0xff]
    %v68 = vld [vmem:[#allocation5 + $0x20] sm:$0xff]
    %v69 = vld [vmem:[#allocation5 + $0x28] sm:$0xff]
    %v70 = vld [vmem:[#allocation5 + $0x30] sm:$0xff]
    %v71 = vld [vmem:[#allocation5 + $0x38] sm:$0xff]
    %v72 = vld [vmem:[#allocation5 + $0x40] sm:$0xff]
    %v73 = vld [vmem:[#allocation5 + $0x48] sm:$0xff]
    %v74 = vld [vmem:[#allocation5 + $0x50] sm:$0xff]
    %v75 = vld [vmem:[#allocation5 + $0x58] sm:$0xff]
    %v76 = vld [vmem:[#allocation5 + $0x60] sm:$0xff]
    %v77 = vld [vmem:[#allocation5 + $0x68] sm:$0xff]
    %v78 = vld [vmem:[#allocation5 + $0x70] sm:$0xff]
    %v79 = vld [vmem:[#allocation5 + $0x78] sm:$0xff]
    %v80 = vld [vmem:[%s2] sm:$0x1]
    %v82 = vlaneseq
    %v83 = vshrl.u32 %v82, 7
    %v84 = vsub.s32 0, %v83
    %v85 = vrot.slane %v80, %v84
    %87 = vmatprep.subr.mxu0 0.0
    %88 = vmatpush1.msra.mxu0 %v64
    %89 = vmatprep.subr.mxu0 0.0
    %90 = vmatpush1.msra.mxu0 %v65
    %91 = vmatprep.subr.mxu0 0.0
    %92 = vmatpush1.msra.mxu0 %v66
    %93 = vmatprep.subr.mxu0 0.0
    %94 = vmatpush1.msra.mxu0 %v67
    %95 = vmatprep.subr.mxu0 0.0
    %96 = vmatpush1.msra.mxu0 %v68
    %97 = vmatprep.subr.mxu0 0.0
    %98 = vmatpush1.msra.mxu0 %v69
    %99 = vmatprep.subr.mxu0 0.0
    %100 = vmatpush1.msra.mxu0 %v70
    %101 = vmatprep.subr.mxu0 0.0
    %102 = vmatpush1.msra.mxu0 %v71
    %103 = vmatprep.subr.mxu0 0.0
    %104 = vmatpush1.msra.mxu0 %v72
    %105 = vmatprep.subr.mxu0 0.0
    %106 = vmatpush1.msra.mxu0 %v73
    %107 = vmatprep.subr.mxu0 0.0
    %108 = vmatpush1.msra.mxu0 %v74
    %109 = vmatprep.subr.mxu0 0.0
    %110 = vmatpush1.msra.mxu0 %v75
    %111 = vmatprep.subr.mxu0 0.0
    %112 = vmatpush1.msra.mxu0 %v76
    %113 = vmatprep.subr.mxu0 0.0
    %114 = vmatpush1.msra.mxu0 %v77
    %115 = vmatprep.subr.mxu0 0.0
    %116 = vmatpush1.msra.mxu0 %v78
    %117 = vmatprep.subr.mxu0 0.0
    %118 = vmatpush1.msra.mxu0 %v79
    %119 = vmatprep.subr.mxu0 0.0
    %120 = vmatpush1.msra.mxu0 0.0
    %121 = vmatprep.subr.mxu0 0.0
    %122 = vmatpush1.msra.mxu0 0.0
    %123 = vmatprep.subr.mxu0 0.0
    %124 = vmatpush1.msra.mxu0 0.0
    %125 = vmatprep.subr.mxu0 0.0
    %126 = vmatpush1.msra.mxu0 0.0
    %127 = vmatprep.subr.mxu0 0.0
    %128 = vmatpush1.msra.mxu0 0.0
    %129 = vmatprep.subr.mxu0 0.0
    %130 = vmatpush1.msra.mxu0 0.0
    %131 = vmatprep.subr.mxu0 0.0
    %132 = vmatpush1.msra.mxu0 0.0
    %133 = vmatprep.subr.mxu0 0.0
    %134 = vmatpush1.msra.mxu0 0.0
    %135 = vmatprep.subr.mxu0 0.0
    %136 = vmatpush1.msra.mxu0 0.0
    %137 = vmatprep.subr.mxu0 0.0
    %138 = vmatpush1.msra.mxu0 0.0
    %139 = vmatprep.subr.mxu0 0.0
    %140 = vmatpush1.msra.mxu0 0.0
    %141 = vmatprep.subr.mxu0 0.0
    %142 = vmatpush1.msra.mxu0 0.0
    %143 = vmatprep.subr.mxu0 0.0
    %144 = vmatpush1.msra.mxu0 0.0
    %145 = vmatprep.subr.mxu0 0.0
    %146 = vmatpush1.msra.mxu0 0.0
    %147 = vmatprep.subr.mxu0 0.0
    %148 = vmatpush1.msra.mxu0 0.0
    %149 = vmatprep.subr.mxu0 0.0
    %150 = vmatpush1.msra.mxu0 0.0
    %151 = vmatprep.mubr.f32.mxu0 0.0
    %152 = vmatmul.mubr.f32.gmra.mrb[0].mxu0 %v62
    %v153 = vpop.f32.mrb[0].mxu0
    %v154 = vadd.f32 %v85, %v153
    %v155 = vpop.f32.mrb[0].mxu0
    %156 = vmatprep.mubr.f32.mxu0 0.0
    %157 = vmatmul.mubr.f32.gmra.mrb[0].mxu0 %v63
    %v158 = vpop.f32.mrb[0].mxu0
    %v159 = vadd.f32 %v85, %v158
    %v160 = vpop.f32.mrb[0].mxu0
    %161 = vdwg.mxu0
    %v162 = vmax.f32 %v154, 0.0
    %v163 = vmax.f32 %v159, 0.0
    %v164 = vld [vmem:[#allocation7] sm:$0xff]
    %v165 = vld [vmem:[#allocation7 + $0x8] sm:$0xff]
    %v166 = vld [vmem:[#allocation7 + $0x10] sm:$0xff]
    %v167 = vld [vmem:[#allocation7 + $0x18] sm:$0xff]
    %v168 = vld [vmem:[#allocation7 + $0x20] sm:$0xff]
    %v169 = vld [vmem:[#allocation7 + $0x28] sm:$0xff]
    %v170 = vld [vmem:[#allocation7 + $0x30] sm:$0xff]
    %v171 = vld [vmem:[#allocation7 + $0x38] sm:$0xff]
    %v172 = vld [vmem:[#allocation7 + $0x40] sm:$0xff]
    %v173 = vld [vmem:[#allocation7 + $0x48] sm:$0xff]
    %v174 = vld [vmem:[#allocation7 + $0x50] sm:$0xff]
    %v175 = vld [vmem:[#allocation7 + $0x58] sm:$0xff]
    %v176 = vld [vmem:[#allocation7 + $0x60] sm:$0xff]
    %v177 = vld [vmem:[#allocation7 + $0x68] sm:$0xff]
    %v178 = vld [vmem:[#allocation7 + $0x70] sm:$0xff]
    %v179 = vld [vmem:[#allocation7 + $0x78] sm:$0xff]
    %v180 = vld [vmem:[%s4] sm:$0x1]
    %v182 = vlaneseq
    %v183 = vshrl.u32 %v182, 7
    %v184 = vsub.s32 0, %v183
    %v185 = vrot.slane %v180, %v184
    %187 = vmatprep.subr.mxu0 0.0
    %188 = vmatpush1.msra.mxu0 %v164
    %189 = vmatprep.subr.mxu0 0.0
    %190 = vmatpush1.msra.mxu0 %v165
    %191 = vmatprep.subr.mxu0 0.0
    %192 = vmatpush1.msra.mxu0 %v166
    %193 = vmatprep.subr.mxu0 0.0
    %194 = vmatpush1.msra.mxu0 %v167
    %195 = vmatprep.subr.mxu0 0.0
    %196 = vmatpush1.msra.mxu0 %v168
    %197 = vmatprep.subr.mxu0 0.0
    %198 = vmatpush1.msra.mxu0 %v169
    %199 = vmatprep.subr.mxu0 0.0
    %200 = vmatpush1.msra.mxu0 %v170
    %201 = vmatprep.subr.mxu0 0.0
    %202 = vmatpush1.msra.mxu0 %v171
    %203 = vmatprep.subr.mxu0 0.0
    %204 = vmatpush1.msra.mxu0 %v172
    %205 = vmatprep.subr.mxu0 0.0
    %206 = vmatpush1.msra.mxu0 %v173
    %207 = vmatprep.subr.mxu0 0.0
    %208 = vmatpush1.msra.mxu0 %v174
    %209 = vmatprep.subr.mxu0 0.0
    %210 = vmatpush1.msra.mxu0 %v175
    %211 = vmatprep.subr.mxu0 0.0
    %212 = vmatpush1.msra.mxu0 %v176
    %213 = vmatprep.subr.mxu0 0.0
    %214 = vmatpush1.msra.mxu0 %v177
    %215 = vmatprep.subr.mxu0 0.0
    %216 = vmatpush1.msra.mxu0 %v178
    %217 = vmatprep.subr.mxu0 0.0
    %218 = vmatpush1.msra.mxu0 %v179
    %219 = vmatprep.subr.mxu0 0.0
    %220 = vmatpush1.msra.mxu0 0.0
    %221 = vmatprep.subr.mxu0 0.0
    %222 = vmatpush1.msra.mxu0 0.0
    %223 = vmatprep.subr.mxu0 0.0
    %224 = vmatpush1.msra.mxu0 0.0
    %225 = vmatprep.subr.mxu0 0.0
    %226 = vmatpush1.msra.mxu0 0.0
    %227 = vmatprep.subr.mxu0 0.0
    %228 = vmatpush1.msra.mxu0 0.0
    %229 = vmatprep.subr.mxu0 0.0
    %230 = vmatpush1.msra.mxu0 0.0
    %231 = vmatprep.subr.mxu0 0.0
    %232 = vmatpush1.msra.mxu0 0.0
    %233 = vmatprep.subr.mxu0 0.0
    %234 = vmatpush1.msra.mxu0 0.0
    %235 = vmatprep.subr.mxu0 0.0
    %236 = vmatpush1.msra.mxu0 0.0
    %237 = vmatprep.subr.mxu0 0.0
    %238 = vmatpush1.msra.mxu0 0.0
    %239 = vmatprep.subr.mxu0 0.0
    %240 = vmatpush1.msra.mxu0 0.0
    %241 = vmatprep.subr.mxu0 0.0
    %242 = vmatpush1.msra.mxu0 0.0
    %243 = vmatprep.subr.mxu0 0.0
    %244 = vmatpush1.msra.mxu0 0.0
    %245 = vmatprep.subr.mxu0 0.0
    %246 = vmatpush1.msra.mxu0 0.0
    %247 = vmatprep.subr.mxu0 0.0
    %248 = vmatpush1.msra.mxu0 0.0
    %249 = vmatprep.subr.mxu0 0.0
    %250 = vmatpush1.msra.mxu0 0.0
    %251 = vmatprep.mubr.f32.mxu0 0.0
    %252 = vmatmul.mubr.f32.gmra.mrb[0].mxu0 %v162
    %v253 = vpop.f32.mrb[0].mxu0
    %v254 = vadd.f32 %v185, %v253
    %v255 = vpop.f32.mrb[0].mxu0
    %256 = vmatprep.mubr.f32.mxu0 0.0
    %257 = vmatmul.mubr.f32.gmra.mrb[0].mxu0 %v163
    %v258 = vpop.f32.mrb[0].mxu0
    %v259 = vadd.f32 %v185, %v258
    %v260 = vpop.f32.mrb[0].mxu0
    %261 = vdwg.mxu0
    %262 = vst [vmem:[#allocation8] sm:$0xff] %v254
    %263 = vst [vmem:[#allocation8 + $0x8] sm:$0xff] %v259
    // Predicated region
    $region34: #{tpu_custom_call.1} parent=1 // pred_check
      _
    $region35: #{tpu_custom_call.1} parent=1 // pred_check_branch
      %265 = sbr.rel (0) target = $region37
    $region36: #{tpu_custom_call.1} parent=1 // pred_region
      %s267 = ssub.s32 256, 256
      %268 = vsyncadd [#allocation4], %s267
      %s269 = sshll.u32 [#allocation8], 4
      %s270 = int_to_ptr.vmem [resolvable:$true] %s269
      %275 = dma.vmem_to_hbm [thread:$0]  %s270, 256, %s5, [#allocation4], 128, 128, 8
    $region37: #{tpu_custom_call.1} parent=1 // pred_fallthru
      _
    // Predicated region
    $region38: #{tpu_custom_call.1} parent=1 // pred_check
      _
    $region39: #{tpu_custom_call.1} parent=1 // pred_check_branch
      %277 = sbr.rel (0) target = $region41
    $region40: #{tpu_custom_call.1} parent=1 // pred_region
      %278 = dma.done [#allocation4], 256
    $region41: #{tpu_custom_call.1} parent=1 // pred_fallthru
      _
    %279 = vsyncpa [#allocation3], 1
    %280 = vsyncpa [#allocation6], 1
    %281 = vsyncpa [#allocation4], 1

</llo_original>
